<compile_context>
chip_gen: v5e
topology: v5e:2x2
jax: 0.10.0
libtpu: 0.0.40
codegen_flags: <defaults>
</compile_context>

<pallas_src>
import functools

import jax
import jax.numpy as jnp
from jax import lax
from jax.experimental import pallas as pl
from jax.experimental.pallas import tpu as pltpu


def _fused_gat_kernel(x_ref, w_ref, a_ref, gl_ref, out_ref, *, out_c, compute_dtype):
    """One batch element per grid step. All math in [N, feature] row-major form."""
    f32 = jnp.float32

    # ---- learned adjacency (fused): adj = softmax(relu(GL @ GL^T), -1) + I -------------
    gl = gl_ref[...].astype(compute_dtype)                              # [N, G]
    s = lax.dot_general(gl, gl, (((1,), (1,)), ((), ())),               # GL @ GL^T
                        preferred_element_type=f32)                     # [N, N]
    s = jnp.maximum(s, 0.0)                                             # relu
    s = s - jnp.max(s, axis=-1, keepdims=True)                          # stable softmax
    p = jnp.exp(s)
    sm = p * pl.reciprocal(jnp.sum(p, axis=-1, keepdims=True), approx=True)
    n = sm.shape[0]
    row = lax.broadcasted_iota(jnp.int32, (n, n), 0)
    col = lax.broadcasted_iota(jnp.int32, (n, n), 1)
    # (softmax(...) + I) > 0  <=>  softmax(...) > 0 or on-diagonal (softmax is >= 0).
    adj_mask = jnp.logical_or(sm > 0.0, row == col)                     # [N, N] bool

    # ---- h = x @ W  (input pre-transposed in the wrapper: x is [N, in_c]) --------------
    x = x_ref[...].astype(compute_dtype)                                # [N, in_c]
    w = w_ref[...].astype(compute_dtype)                                # [in_c, out_c]
    h = jnp.dot(x, w, preferred_element_type=f32)                       # [N, out_c] f32

    # ---- e[i, j] = leakyrelu(h[i]·a1 + h[j]·a2)  (no [N,N,2*out_c], no transposes) -----
    a1 = a_ref[0:out_c, :]                                              # [out_c, 1]
    a2 = a_ref[out_c:, :]                                               # [out_c, 1]
    e1 = jnp.dot(h, a1, preferred_element_type=f32)                     # [N, 1]
    e2 = lax.dot_general(a2, h, (((0,), (1,)), ((), ())),               # [1, N] row directly
                         preferred_element_type=f32)
    e = e1 + e2                                                         # [N, N]
    e = jnp.where(e > 0, e, 0.01 * e)                                   # LeakyReLU(0.01)

    # ---- masked softmax over keys (dim -1) ----------------------------------------------
    att = jnp.where(adj_mask, e, f32(-1e12))
    att = att - jnp.max(att, axis=-1, keepdims=True)
    pe = jnp.exp(att)
    att = pe * pl.reciprocal(jnp.sum(pe, axis=-1, keepdims=True), approx=True)
    # TODO(synk): dropout on `att` and `h` is identity in eval mode; not applied here.

    # ---- out[c, q] = sum_k h[k, c] * att[q, k]  -> [out_c, N] directly (no hp.T) --------
    ht = lax.dot_general(h.astype(compute_dtype), att.astype(compute_dtype),
                         (((0,), (1,)), ((), ())),
                         preferred_element_type=f32)                    # [out_c, N]
    out_ref[...] = jnp.maximum(ht, 0.0).astype(out_ref.dtype)           # relu + store


def interposition_attention(inp, W, a, GL, *, compute_dtype=jnp.float32):
    """inp: [B, in_c, N]; W: [in_c, out_c]; a: [2*out_c, 1]; GL: [N, grap_size].

    Returns [B, out_c, N]. compute_dtype=jnp.bfloat16 runs the MXU contractions in bf16
    (f32 accumulation); elementwise / softmax math stays in f32.
    """
    B, in_c, N = inp.shape
    out_c = W.shape[1]
    grap_size = GL.shape[1]

    # Layout plumbing in the wrapper (XLA fuses it into the input copy): [B, N, in_c].
    x = jnp.swapaxes(inp, 1, 2)

    kernel = functools.partial(_fused_gat_kernel, out_c=out_c, compute_dtype=compute_dtype)

    return pl.pallas_call(
        kernel,
        out_shape=jax.ShapeDtypeStruct((B, out_c, N), jnp.float32),
        grid=(B,),
        in_specs=[
            pl.BlockSpec((pl.Squeezed(), N, in_c), lambda b: (b, 0, 0)),   # per-batch x
            pl.BlockSpec((in_c, out_c), lambda b: (0, 0)),                 # W (grid-invariant)
            pl.BlockSpec((2 * out_c, 1), lambda b: (0, 0)),                # a (grid-invariant)
            pl.BlockSpec((N, grap_size), lambda b: (0, 0)),                # GL (grid-invariant)
        ],
        out_specs=pl.BlockSpec((pl.Squeezed(), out_c, N), lambda b: (b, 0, 0)),
        compiler_params=pltpu.CompilerParams(dimension_semantics=("parallel",)),
    )(x, W, a, GL)


def reference(inp, W, a, GL):
    """Pure-JAX replica of the PyTorch forward (eval mode)."""
    adj = jax.nn.softmax(jax.nn.relu(GL @ GL.T), axis=-1)
    x = jnp.swapaxes(inp, -2, -1)                                       # [B, N, in_c]
    N = x.shape[1]
    adj = adj + jnp.eye(N, dtype=adj.dtype)
    h = x @ W                                                           # [B, N, out_c]
    out_c = W.shape[1]
    a1 = a[:out_c, :]                                                   # [out_c, 1]
    a2 = a[out_c:, :]
    e = (h @ a1) + jnp.swapaxes(h @ a2, -2, -1)                         # [B, N, N]
    e = jnp.where(e > 0, e, 0.01 * e)
    att = jnp.where(adj > 0, e, -1e12)
    att = jax.nn.softmax(att, axis=2)
    hp = jax.nn.relu(att @ h)
    return jnp.swapaxes(hp, -2, -1)                                     # [B, out_c, N]


if __name__ == "__main__":
    B, in_c, out_c, N, grap_size = 2, 8, 32, 16, 8

    key = jax.random.PRNGKey(0)
    k1, k2, k3, k4 = jax.random.split(key, 4)

    # Deterministic parameter init mirroring the PyTorch initializers.
    bW = (6.0 / (in_c + out_c)) ** 0.5                # xavier_uniform_
    W = jax.random.uniform(k1, (in_c, out_c), jnp.float32, -bW, bW)
    ba = (6.0 / (2 * out_c + 1)) ** 0.5               # xavier_uniform_
    a = jax.random.uniform(k2, (2 * out_c, 1), jnp.float32, -ba, ba)
    bGL = (6.0 / grap_size) ** 0.5                    # kaiming_uniform_ (fan_in)
    GL = jax.random.uniform(k3, (N, grap_size), jnp.float32, -bGL, bGL)
    # GL2 is defined in __init__ but unused in forward; omitted.

    inp = jax.random.normal(k4, (B, in_c, N), jnp.float32)

    ref = reference(inp, W, a, GL)

    # f32 MXU path (default): tight check against the PyTorch-faithful reference.
    out = jax.block_until_ready(interposition_attention(inp, W, a, GL))
    assert out.shape == (B, out_c, N), out.shape
    assert jnp.allclose(out, ref, rtol=5e-3, atol=5e-3), float(jnp.max(jnp.abs(out - ref)))

    # bf16 MXU operands (f32 accumulation): looser check (bf16 operand rounding).
    out_bf16 = jax.block_until_ready(
        interposition_attention(inp, W, a, GL, compute_dtype=jnp.bfloat16))
    assert jnp.allclose(out_bf16, ref, rtol=5e-2, atol=5e-2), \
        float(jnp.max(jnp.abs(out_bf16 - ref)))

    print("KERNEL_OK")
</pallas_src>

<mosaic_0001>
module attributes {stable_mosaic.version = 11 : i64} {
  func.func @_fused_gat_kernel(%arg0: i32, %arg1: memref<1x16x8xf32, #tpu.memory_space<vmem>>, %arg2: memref<8x32xf32, #tpu.memory_space<vmem>>, %arg3: memref<64x1xf32, #tpu.memory_space<vmem>>, %arg4: memref<16x8xf32, #tpu.memory_space<vmem>>, %arg5: memref<1x32x16xf32, #tpu.memory_space<vmem>>) attributes {dimension_semantics = [#tpu.dimension_semantics<parallel>], iteration_bounds = array<i64: 2>, scalar_prefetch = 0 : i64, scratch_operands = 0 : i64, tpu.core_type = #tpu.core_type<tc>, window_params = [{transform_indices = @transform_0, window_bounds = array<i64: 1, 16, 8>}, {pipeline_mode = #tpu.pipeline_mode<synchronous>, transform_indices = @transform_1, window_bounds = array<i64: 8, 32>}, {pipeline_mode = #tpu.pipeline_mode<synchronous>, transform_indices = @transform_2, window_bounds = array<i64: 64, 1>}, {pipeline_mode = #tpu.pipeline_mode<synchronous>, transform_indices = @transform_3, window_bounds = array<i64: 16, 8>}, {transform_indices = @transform_4, window_bounds = array<i64: 1, 32, 16>}]} {
    %c0 = arith.constant 0 : index
    %c0_0 = arith.constant 0 : index
    %0 = vector.load %arg4[%c0, %c0_0] : memref<16x8xf32, #tpu.memory_space<vmem>>, vector<16x8xf32>
    %cst = arith.constant dense<0.000000e+00> : vector<16x16xf32>
    %1 = tpu.matmul %0, %0, %cst {dimension_numbers = #tpu.dot_dimension_numbers<[1], [1], [0], [0], [0, 0, 1, 0], [], []>} : vector<16x8xf32>, vector<16x8xf32>, vector<16x16xf32> -> vector<16x16xf32>
    %cst_1 = arith.constant 0.000000e+00 : f32
    %2 = vector.broadcast %cst_1 : f32 to vector<16x16xf32>
    %3 = arith.maximumf %1, %2 : vector<16x16xf32>
    %cst_2 = arith.constant dense<0xFF800000> : vector<16xf32>
    %4 = vector.multi_reduction <maximumf>, %3, %cst_2 [1] : vector<16x16xf32> to vector<16xf32>
    %5 = vector.shape_cast %4 : vector<16xf32> to vector<16x1xf32>
    %6 = vector.broadcast %5 : vector<16x1xf32> to vector<16x16xf32>
    %7 = arith.subf %3, %6 : vector<16x16xf32>
    %8 = math.exp %7 : vector<16x16xf32>
    %cst_3 = arith.constant dense<0.000000e+00> : vector<16xf32>
    %9 = vector.multi_reduction <add>, %8, %cst_3 [1] : vector<16x16xf32> to vector<16xf32>
    %10 = vector.shape_cast %9 : vector<16xf32> to vector<16x1xf32>
    %11 = tpu.reciprocal %10 {approx = true} : vector<16x1xf32> -> vector<16x1xf32>
    %12 = vector.broadcast %11 : vector<16x1xf32> to vector<16x16xf32>
    %13 = arith.mulf %8, %12 : vector<16x16xf32>
    %14 = tpu.iota {dimensions = array<i32: 0>} : vector<16x16xi32>
    %15 = tpu.iota {dimensions = array<i32: 1>} : vector<16x16xi32>
    %cst_4 = arith.constant 0.000000e+00 : f32
    %16 = vector.broadcast %cst_4 : f32 to vector<16x16xf32>
    %17 = arith.cmpf ogt, %13, %16 : vector<16x16xf32>
    %18 = arith.cmpi eq, %14, %15 : vector<16x16xi32>
    %19 = arith.ori %17, %18 : vector<16x16xi1>
    %c0_5 = arith.constant 0 : index
    %c0_6 = arith.constant 0 : index
    %c0_7 = arith.constant 0 : index
    %20 = vector.load %arg1[%c0_5, %c0_6, %c0_7] : memref<1x16x8xf32, #tpu.memory_space<vmem>>, vector<1x16x8xf32>
    %21 = vector.shape_cast %20 : vector<1x16x8xf32> to vector<16x8xf32>
    %c0_8 = arith.constant 0 : index
    %c0_9 = arith.constant 0 : index
    %22 = vector.load %arg2[%c0_8, %c0_9] : memref<8x32xf32, #tpu.memory_space<vmem>>, vector<8x32xf32>
    %cst_10 = arith.constant dense<0.000000e+00> : vector<16x32xf32>
    %23 = tpu.matmul %21, %22, %cst_10 {dimension_numbers = #tpu.dot_dimension_numbers<[1], [0], [0], [1], [0, 0, 1, 1], [], []>} : vector<16x8xf32>, vector<8x32xf32>, vector<16x32xf32> -> vector<16x32xf32>
    %c0_11 = arith.constant 0 : index
    %c0_12 = arith.constant 0 : index
    %24 = vector.load %arg3[%c0_11, %c0_12] : memref<64x1xf32, #tpu.memory_space<vmem>>, vector<32x1xf32>
    %c32 = arith.constant 32 : index
    %c0_13 = arith.constant 0 : index
    %25 = vector.load %arg3[%c32, %c0_13] : memref<64x1xf32, #tpu.memory_space<vmem>>, vector<32x1xf32>
    %cst_14 = arith.constant dense<0.000000e+00> : vector<16x1xf32>
    %26 = tpu.matmul %23, %24, %cst_14 {dimension_numbers = #tpu.dot_dimension_numbers<[1], [0], [0], [1], [0, 0, 1, 1], [], []>} : vector<16x32xf32>, vector<32x1xf32>, vector<16x1xf32> -> vector<16x1xf32>
    %cst_15 = arith.constant dense<0.000000e+00> : vector<1x16xf32>
    %27 = tpu.matmul %25, %23, %cst_15 {dimension_numbers = #tpu.dot_dimension_numbers<[0], [1], [1], [0], [0, 1, 1, 0], [], []>} : vector<32x1xf32>, vector<16x32xf32>, vector<1x16xf32> -> vector<1x16xf32>
    %28 = vector.broadcast %26 : vector<16x1xf32> to vector<16x16xf32>
    %29 = vector.broadcast %27 : vector<1x16xf32> to vector<16x16xf32>
    %30 = arith.addf %28, %29 : vector<16x16xf32>
    %cst_16 = arith.constant 0.000000e+00 : f32
    %31 = vector.broadcast %cst_16 : f32 to vector<16x16xf32>
    %32 = arith.cmpf ogt, %30, %31 : vector<16x16xf32>
    %cst_17 = arith.constant 0.00999999977 : f32
    %33 = vector.broadcast %cst_17 : f32 to vector<16x16xf32>
    %34 = arith.mulf %33, %30 : vector<16x16xf32>
    %35 = arith.select %32, %30, %34 : vector<16x16xi1>, vector<16x16xf32>
    %cst_18 = arith.constant -9.99999995E+11 : f32
    %36 = vector.broadcast %cst_18 : f32 to vector<16x16xf32>
    %37 = arith.select %19, %35, %36 : vector<16x16xi1>, vector<16x16xf32>
    %cst_19 = arith.constant dense<0xFF800000> : vector<16xf32>
    %38 = vector.multi_reduction <maximumf>, %37, %cst_19 [1] : vector<16x16xf32> to vector<16xf32>
    %39 = vector.shape_cast %38 : vector<16xf32> to vector<16x1xf32>
    %40 = vector.broadcast %39 : vector<16x1xf32> to vector<16x16xf32>
    %41 = arith.subf %37, %40 : vector<16x16xf32>
    %42 = math.exp %41 : vector<16x16xf32>
    %cst_20 = arith.constant dense<0.000000e+00> : vector<16xf32>
    %43 = vector.multi_reduction <add>, %42, %cst_20 [1] : vector<16x16xf32> to vector<16xf32>
    %44 = vector.shape_cast %43 : vector<16xf32> to vector<16x1xf32>
    %45 = tpu.reciprocal %44 {approx = true} : vector<16x1xf32> -> vector<16x1xf32>
    %46 = vector.broadcast %45 : vector<16x1xf32> to vector<16x16xf32>
    %47 = arith.mulf %42, %46 : vector<16x16xf32>
    %cst_21 = arith.constant dense<0.000000e+00> : vector<32x16xf32>
    %48 = tpu.matmul %23, %47, %cst_21 {dimension_numbers = #tpu.dot_dimension_numbers<[0], [1], [1], [0], [0, 1, 1, 0], [], []>} : vector<16x32xf32>, vector<16x16xf32>, vector<32x16xf32> -> vector<32x16xf32>
    %cst_22 = arith.constant 0.000000e+00 : f32
    %49 = vector.broadcast %cst_22 : f32 to vector<32x16xf32>
    %50 = arith.maximumf %48, %49 : vector<32x16xf32>
    %c0_23 = arith.constant 0 : index
    %c0_24 = arith.constant 0 : index
    %c0_25 = arith.constant 0 : index
    %51 = vector.load %arg5[%c0_23, %c0_24, %c0_25] : memref<1x32x16xf32, #tpu.memory_space<vmem>>, vector<1x32x16xf32>
    %52 = vector.shape_cast %51 : vector<1x32x16xf32> to vector<32x16xf32>
    %53 = vector.shape_cast %50 : vector<32x16xf32> to vector<1x32x16xf32>
    tpu.vector_store %arg5[%c0_23, %c0_24, %c0_25], %53 {strides = array<i32>} : memref<1x32x16xf32, #tpu.memory_space<vmem>>, vector<1x32x16xf32>,
    return
  }
  func.func @transform_0(%arg0: i32) -> (i32, i32, i32) {
    %c0_i32 = arith.constant 0 : i32
    %c0_i32_0 = arith.constant 0 : i32
    %c0_i32_1 = arith.constant 0 : i32
    return %arg0, %c0_i32, %c0_i32_0 : i32, i32, i32
  }
  func.func @transform_1(%arg0: i32) -> (i32, i32) {
    %c0_i32 = arith.constant 0 : i32
    %c0_i32_0 = arith.constant 0 : i32
    %c0_i32_1 = arith.constant 0 : i32
    return %c0_i32, %c0_i32_0 : i32, i32
  }
  func.func @transform_2(%arg0: i32) -> (i32, i32) {
    %c0_i32 = arith.constant 0 : i32
    %c0_i32_0 = arith.constant 0 : i32
    %c0_i32_1 = arith.constant 0 : i32
    return %c0_i32, %c0_i32_0 : i32, i32
  }
  func.func @transform_3(%arg0: i32) -> (i32, i32) {
    %c0_i32 = arith.constant 0 : i32
    %c0_i32_0 = arith.constant 0 : i32
    %c0_i32_1 = arith.constant 0 : i32
    return %c0_i32, %c0_i32_0 : i32, i32
  }
  func.func @transform_4(%arg0: i32) -> (i32, i32, i32) {
    %c0_i32 = arith.constant 0 : i32
    %c0_i32_0 = arith.constant 0 : i32
    %c0_i32_1 = arith.constant 0 : i32
    return %arg0, %c0_i32, %c0_i32_0 : i32, i32, i32
  }
}

</mosaic_0001>

<llo_original>
// kernel: tpu_custom_call.1
$region0: #{tpu_custom_call.1}
  #allocation0 [shape = 'u32[]', space=smem, size = 0x4, offset = 0x4, fixed_abs, tag = 'smem constant byte address 0x4 - core index']
  #allocation1 [shape = 'u32[72,128]{1,0:T(1,128)}', space=vmem, size = 0x9000, scoped, tag = 'internal scratch']
  %s0 = inlined_call_operand.vmem [shape: f32[2,16,8], index: 0, kind: input, shape index: {}]
  %s1 = inlined_call_operand.vmem [shape: f32[8,32], index: 1, kind: input, shape index: {}]
  %s2 = inlined_call_operand.vmem [shape: f32[64,1], index: 2, kind: input, shape index: {}]
  %s3 = inlined_call_operand.vmem [shape: f32[16,8], index: 3, kind: input, shape index: {}]
  %s4 = inlined_call_operand.vmem [shape: f32[2,32,16], index: 4, kind: output, shape index: {}]
  %s5 = sld [smem:[#allocation0]]
  $region49: #{tpu_custom_call.1} parent=0
    _
  %s7 = ssub.s32 1, %s5
  %s8 = scalar_select 0, %s7, %s5
  loop: start=0, step=1, limit=4
  $region2: #{tpu_custom_call.1} parent=0 // loop_pre_header
    _
  $region3: #{tpu_custom_call.1} parent=0 // loop_header
    %s10 = sphi 0, %s14
    %p11 = scmp.ge.s32.totalorder %s10, 4
    %s20 = sphi 0, %s22
    %s23 = sphi 0, %s20
    %s24 = sphi 0, %s23
    %s40 = sphi 0, %s24
    %s44 = sphi 0, %s44
    %s46 = sphi 0, %s44
    %s47 = sphi 0, %s46
    %s61 = sphi 0, %s47
    %s65 = sphi 0, %s65
    %s67 = sphi 0, %s65
    %s68 = sphi 0, %s67
    %s82 = sphi 0, %s68
    %s86 = sphi 0, %s86
    %s88 = sphi 0, %s86
    %s89 = sphi 0, %s88
    %s103 = sphi 0, %s89
    %s109 = sphi 0, %s111
    %s112 = sphi 0, %s109
    %s113 = sphi 0, %s112
    %s129 = sphi 0, %s113
  $region4: #{tpu_custom_call.1} parent=0 // loop_header_branch
    %13 = sbr.rel (%p11) target = $region8
  $region5: #{tpu_custom_call.1} parent=0 // loop_body
    %s15 = ssub.s32 %s10, 1
    %s16 = ssub.s32 %s10, 2
    %s17 = sadd.s32 %s10, 1
    %s18 = ssub.s32 %s10, %s17
    %p19 = scmp.eq.s32.totalorder %s18, 0
    %s21 = sadd.s32 %s20, 1
    %s22 = scalar_select %p19, %s20, %s21
    %p25 = pneg %p19
    %p26 = scmp.eq.s32.totalorder %s10, 1
    %p27 = por %p25, %p26
    %p28 = scmp.ne.s32.totalorder %s20, %s23
    %p29 = scmp.eq.s32.totalorder %s10, 0
    %p30 = por %p28, %p29
    %p31 = scmp.ne.s32.totalorder %s20, %s23
    %p32 = scmp.eq.s32.totalorder %s15, 1
    %p33 = por %p31, %p32
    %p34 = scmp.ne.s32.totalorder %s23, %s24
    %p35 = scmp.eq.s32.totalorder %s15, 0
    %p36 = por %p34, %p35
    %p37 = scmp.ne.s32.totalorder %s23, %s24
    %p38 = scmp.eq.s32.totalorder %s16, 1
    %p39 = por %p37, %p38
    %p41 = scmp.ne.s32.totalorder %s24, %s40
    %p42 = scmp.eq.s32.totalorder %s16, 0
    %p43 = por %p41, %p42
    %s45 = sadd.s32 %s44, 1
    %p48 = scmp.eq.s32.totalorder %s10, 1
    %p49 = scmp.ne.s32.totalorder %s44, %s46
    %p50 = scmp.eq.s32.totalorder %s10, 0
    %p51 = por %p49, %p50
    %p52 = scmp.ne.s32.totalorder %s44, %s46
    %p53 = scmp.eq.s32.totalorder %s15, 1
    %p54 = por %p52, %p53
    %p55 = scmp.ne.s32.totalorder %s46, %s47
    %p56 = scmp.eq.s32.totalorder %s15, 0
    %p57 = por %p55, %p56
    %p58 = scmp.ne.s32.totalorder %s46, %s47
    %p59 = scmp.eq.s32.totalorder %s16, 1
    %p60 = por %p58, %p59
    %p62 = scmp.ne.s32.totalorder %s47, %s61
    %p63 = scmp.eq.s32.totalorder %s16, 0
    %p64 = por %p62, %p63
    %s66 = sadd.s32 %s65, 1
    %p69 = scmp.eq.s32.totalorder %s10, 1
    %p70 = scmp.ne.s32.totalorder %s65, %s67
    %p71 = scmp.eq.s32.totalorder %s10, 0
    %p72 = por %p70, %p71
    %p73 = scmp.ne.s32.totalorder %s65, %s67
    %p74 = scmp.eq.s32.totalorder %s15, 1
    %p75 = por %p73, %p74
    %p76 = scmp.ne.s32.totalorder %s67, %s68
    %p77 = scmp.eq.s32.totalorder %s15, 0
    %p78 = por %p76, %p77
    %p79 = scmp.ne.s32.totalorder %s67, %s68
    %p80 = scmp.eq.s32.totalorder %s16, 1
    %p81 = por %p79, %p80
    %p83 = scmp.ne.s32.totalorder %s68, %s82
    %p84 = scmp.eq.s32.totalorder %s16, 0
    %p85 = por %p83, %p84
    %s87 = sadd.s32 %s86, 1
    %p90 = scmp.eq.s32.totalorder %s10, 1
    %p91 = scmp.ne.s32.totalorder %s86, %s88
    %p92 = scmp.eq.s32.totalorder %s10, 0
    %p93 = por %p91, %p92
    %p94 = scmp.ne.s32.totalorder %s86, %s88
    %p95 = scmp.eq.s32.totalorder %s15, 1
    %p96 = por %p94, %p95
    %p97 = scmp.ne.s32.totalorder %s88, %s89
    %p98 = scmp.eq.s32.totalorder %s15, 0
    %p99 = por %p97, %p98
    %p100 = scmp.ne.s32.totalorder %s88, %s89
    %p101 = scmp.eq.s32.totalorder %s16, 1
    %p102 = por %p100, %p101
    %p104 = scmp.ne.s32.totalorder %s89, %s103
    %p105 = scmp.eq.s32.totalorder %s16, 0
    %p106 = por %p104, %p105
    %s107 = ssub.s32 %s10, %s17
    %p108 = scmp.eq.s32.totalorder %s107, 0
    %s110 = sadd.s32 %s109, 1
    %s111 = scalar_select %p108, %s109, %s110
    %p114 = pneg %p108
    %p115 = scmp.eq.s32.totalorder %s10, 1
    %p116 = por %p114, %p115
    %p117 = scmp.ne.s32.totalorder %s109, %s112
    %p118 = scmp.eq.s32.totalorder %s10, 0
    %p119 = por %p117, %p118
    %p120 = scmp.ne.s32.totalorder %s109, %s112
    %p121 = scmp.eq.s32.totalorder %s15, 1
    %p122 = por %p120, %p121
    %p123 = scmp.ne.s32.totalorder %s112, %s113
    %p124 = scmp.eq.s32.totalorder %s15, 0
    %p125 = por %p123, %p124
    %p126 = scmp.ne.s32.totalorder %s112, %s113
    %p127 = scmp.eq.s32.totalorder %s16, 1
    %p128 = por %p126, %p127
    %p130 = scmp.ne.s32.totalorder %s113, %s129
    %p131 = scmp.eq.s32.totalorder %s16, 0
    %p132 = por %p130, %p131
    %p133 = scmp.le.s32.totalorder 1, %s10
    %p134 = scmp.lt.s32.totalorder %s10, 3
    %p135 = pnand %p133, %p134
    %p136 = pneg %p135
    // Predicated region
    $region9: #{tpu_custom_call.1} parent=5 // pred_check
      _
    $region10: #{tpu_custom_call.1} parent=5 // pred_check_branch
      %138 = sbr.rel (%p135) target = $region12
    $region11: #{tpu_custom_call.1} parent=5 // pred_region
      %s139 = ssub.s32 %s10, 1
      // Predicated region
      $region13: #{tpu_custom_call.1} parent=11 // pred_check
        %p140 = pneg %p57
      $region14: #{tpu_custom_call.1} parent=11 // pred_check_branch
        %142 = sbr.rel (%p140) target = $region16
      $region15: #{tpu_custom_call.1} parent=11 // pred_region
        _
      $region16: #{tpu_custom_call.1} parent=11 // pred_fallthru
        _
      // Predicated region
      $region17: #{tpu_custom_call.1} parent=11 // pred_check
        %p143 = pneg %p78
      $region18: #{tpu_custom_call.1} parent=11 // pred_check_branch
        %145 = sbr.rel (%p143) target = $region20
      $region19: #{tpu_custom_call.1} parent=11 // pred_region
        _
      $region20: #{tpu_custom_call.1} parent=11 // pred_fallthru
        _
      // Predicated region
      $region21: #{tpu_custom_call.1} parent=11 // pred_check
        %p146 = pneg %p99
      $region22: #{tpu_custom_call.1} parent=11 // pred_check_branch
        %148 = sbr.rel (%p146) target = $region24
      $region23: #{tpu_custom_call.1} parent=11 // pred_region
        _
      $region24: #{tpu_custom_call.1} parent=11 // pred_fallthru
        _
    $region12: #{tpu_custom_call.1} parent=5 // pred_fallthru
      _
    %p149 = scmp.lt.s32.totalorder %s10, 2
    // Predicated region
    $region25: #{tpu_custom_call.1} parent=5 // pred_check
      %p150 = pneg %p149
    $region26: #{tpu_custom_call.1} parent=5 // pred_check_branch
      %152 = sbr.rel (%p150) target = $region28
    $region27: #{tpu_custom_call.1} parent=5 // pred_region
      // Predicated region
      $region29: #{tpu_custom_call.1} parent=27 // pred_check
        %p153 = pneg %p30
      $region30: #{tpu_custom_call.1} parent=27 // pred_check_branch
        %155 = sbr.rel (%p153) target = $region32
      $region31: #{tpu_custom_call.1} parent=27 // pred_region
        %p156 = scmp.lt.s32.totalorder %s10, 1
        %s157 = scalar_select %p156, %s10, 1
        %s158 = smul.addr %s157, 2
        %s159 = smul.addr %s158, 8
        %s160 = scalar_lea.vmem %s0, %s159
      $region32: #{tpu_custom_call.1} parent=27 // pred_fallthru
        _
    $region28: #{tpu_custom_call.1} parent=5 // pred_fallthru
      _
    %p161 = scmp.le.s32.totalorder 1, %s10
    %p162 = scmp.lt.s32.totalorder %s10, 3
    %p163 = pnand %p161, %p162
    %p164 = pneg %p163
    // Predicated region
    $region33: #{tpu_custom_call.1} parent=5 // pred_check
      _
    $region34: #{tpu_custom_call.1} parent=5 // pred_check_branch
      %166 = sbr.rel (%p163) target = $region36
    $region35: #{tpu_custom_call.1} parent=5 // pred_region
      %s167 = ssub.s32 %s10, 1
      %p168 = scmp.lt.s32.totalorder %s15, 1
      %s169 = scalar_select %p168, %s15, 1
      %s170 = smul.addr %s169, 2
      %s171 = smul.addr %s170, 8
      %s172 = scalar_lea.vmem %s0, %s171
      %p173 = pneg %p36
      %p174 = pneg %p33
      %p175 = pneg %p57
      %p176 = pneg %p54
      %p177 = pneg %p78
      %p178 = pneg %p75
      %p179 = pneg %p99
      %p180 = pneg %p96
      %p181 = pneg %p125
      %p182 = pneg %p122
      %p183 = scmp.lt.s32.totalorder %s15, 1
      %s184 = scalar_select %p183, %s15, 1
      %s185 = smul.addr %s184, 4
      %s186 = smul.addr %s185, 8
      %s187 = scalar_lea.vmem %s4, %s186
      %p188 = scmp.lt.s32.totalorder %s15, 1
      %s189 = scalar_select %p188, %s15, 1
      %s190 = smul.addr %s189, 2
      %s191 = smul.addr %s190, 8
      %s192 = scalar_lea.vmem %s0, %s191
      %p193 = scmp.lt.s32.totalorder %s15, 1
      %s194 = scalar_select %p193, %s15, 1
      %s195 = smul.addr %s194, 4
      %s196 = smul.addr %s195, 8
      %s197 = scalar_lea.vmem %s4, %s196
      %v198 = vld [vmem:[%s3] sm:$0xff]
      %v199 = vld [vmem:[%s3 + $0x8] sm:$0xff]
      %vm200 = vcmask 64512
      %v202 = vsel %vm200, %v198, 0
      %v205 = vsel %vm200, %v199, 0
      %207 = vmatpush.xpose.msra.mxu0 0.0
      %208 = vmatpush.xpose.msra.mxu0 0.0
      %209 = vmatpush.xpose.msra.mxu0 0.0
      %210 = vmatpush.xpose.msra.mxu0 0.0
      %211 = vmatpush.xpose.msra.mxu0 0.0
      %212 = vmatpush.xpose.msra.mxu0 0.0
      %213 = vmatpush.xpose.msra.mxu0 0.0
      %214 = vmatpush.xpose.msra.mxu0 0.0
      %215 = vmatpush.xpose.msra.mxu0 0.0
      %216 = vmatpush.xpose.msra.mxu0 0.0
      %217 = vmatpush.xpose.msra.mxu0 0.0
      %218 = vmatpush.xpose.msra.mxu0 0.0
      %219 = vmatpush.xpose.msra.mxu0 0.0
      %220 = vmatpush.xpose.msra.mxu0 0.0
      %221 = vmatpush.xpose.msra.mxu0 %v205
      %222 = vmatpush.xpose.msra.mxu0 %v202
      %223 = vmatmul.f32.gmra.mxu0 %v202
      %v224 = vpop.f32.mrf.mxu0
      %v225 = vadd.f32 0.0, %v224
      %226 = vmatmul.f32.gmra.mxu0 %v205
      %v227 = vpop.f32.mrf.mxu0
      %v228 = vadd.f32 0.0, %v227
      %229 = vdwg.mxu0
      %v230 = vmax.f32 %v225, 0.0
      %v231 = vmax.f32 %v228, 0.0
      %vm232 = vcmask 130048
      %v233 = vsel %vm232, %v230, -inf
      %234 = vmax.xlane.f32.xlu0 %v233
      %v235 = vpop.xlane.xlu0 %234
      %v236 = vsel %vm232, %v231, -inf
      %237 = vmax.xlane.f32.xlu0 %v236
      %v238 = vpop.xlane.xlu0 %237
      %v239 = vsub.f32 %v230, %v235
      %v240 = vsub.f32 %v231, %v238
      %v241 = vmul.f32 %v239, 1.442695
      %v242 = vpow.pop %v241
      %v243 = vmul.f32 %v240, 1.442695
      %v244 = vpow.pop %v243
      %v245 = vsel %vm232, %v242, 0.0
      %246 = vadd.xlane.f32.xlu0 %v245
      %v247 = vpop.xlane.xlu0 %246
      %v248 = vsel %vm232, %v244, 0.0
      %249 = vadd.xlane.f32.xlu0 %v248
      %v250 = vpop.xlane.xlu0 %249
      %v251 = vrcp.pop %v247
      %v252 = vrcp.pop %v250
      %v253 = vmul.f32 %v242, %v251
      %v254 = vmul.f32 %v244, %v252
      %v255 = vlaneseq
      %v256 = vshrl.u32 %v255, 7
      %v257 = vadd.s32 %v256, 8
      %v258 = vlaneseq
      %v259 = vand.u32 %v258, 127
      %vm260 = vcmp.gt.f32.partialorder %v253, 0.0
      %vm261 = vcmp.gt.f32.partialorder %v254, 0.0
      %vm262 = vcmp.eq.s32.totalorder %v256, %v259
      %vm263 = vcmp.eq.s32.totalorder %v257, %v259
      %vm264 = vmor %vm260, %vm262
      %vm265 = vmor %vm261, %vm263
      %v266 = vld [vmem:[%s192] sm:$0xff]
      %v267 = vld [vmem:[%s192 + $0x8] sm:$0xff]
      %v268 = vld [vmem:[%s1] sm:$0xff]
      %v270 = vsel %vm200, %v266, 0
      %v273 = vsel %vm200, %v267, 0
      %275 = vmatpush.msra.mxu0 0.0
      %276 = vmatpush.msra.mxu0 0.0
      %277 = vmatpush.msra.mxu0 0.0
      %278 = vmatpush.msra.mxu0 0.0
      %279 = vmatpush.msra.mxu0 0.0
      %280 = vmatpush.msra.mxu0 0.0
      %281 = vmatpush.msra.mxu0 0.0
      %282 = vmatpush.msra.mxu0 0.0
      %283 = vmatpush.msra.mxu0 0.0
      %284 = vmatpush.msra.mxu0 0.0
      %285 = vmatpush.msra.mxu0 0.0
      %286 = vmatpush.msra.mxu0 0.0
      %287 = vmatpush.msra.mxu0 0.0
      %288 = vmatpush.msra.mxu0 0.0
      %289 = vmatpush.msra.mxu0 0.0
      %290 = vmatpush.msra.mxu0 %v268
      %291 = vmatmul.f32.gmra.mxu0 %v270
      %v292 = vpop.f32.mrf.mxu0
      %v293 = vadd.f32 0.0, %v292
      %294 = vmatmul.f32.gmra.mxu0 %v273
      %v295 = vpop.f32.mrf.mxu0
      %v296 = vadd.f32 0.0, %v295
      %297 = vdwg.mxu0
      %v298 = vld [vmem:[%s2] sm:$0xff]
      %v299 = vld [vmem:[%s2 + $0x8] sm:$0xff]
      %v300 = vld [vmem:[%s2 + $0x10] sm:$0xff]
      %v301 = vld [vmem:[%s2 + $0x18] sm:$0xff]
      %v302 = vld [vmem:[%s2 + $0x20] sm:$0xff]
      %v303 = vld [vmem:[%s2 + $0x28] sm:$0xff]
      %v304 = vld [vmem:[%s2 + $0x30] sm:$0xff]
      %v305 = vld [vmem:[%s2 + $0x38] sm:$0xff]
      %vm306 = vcmask 261120
      %v308 = vsel %vm306, %v293, 0
      %v311 = vsel %vm306, %v296, 0
      %313 = vmatpush.msra.mxu0 0.0
      %314 = vmatpush.msra.mxu0 0.0
      %315 = vmatpush.msra.mxu0 0.0
      %316 = vmatpush.msra.mxu0 0.0
      %317 = vmatpush.msra.mxu0 0.0
      %318 = vmatpush.msra.mxu0 0.0
      %319 = vmatpush.msra.mxu0 0.0
      %320 = vmatpush.msra.mxu0 0.0
      %321 = vmatpush.msra.mxu0 0.0
      %322 = vmatpush.msra.mxu0 0.0
      %323 = vmatpush.msra.mxu0 0.0
      %324 = vmatpush.msra.mxu0 0.0
      %325 = vmatpush.msra.mxu0 %v301
      %326 = vmatpush.msra.mxu0 %v300
      %327 = vmatpush.msra.mxu0 %v299
      %328 = vmatpush.msra.mxu0 %v298
      %329 = vmatmul.f32.gmra.mxu0 %v308
      %v330 = vpop.f32.mrf.mxu0
      %v331 = vadd.f32 0.0, %v330
      %332 = vmatmul.f32.gmra.mxu0 %v311
      %v333 = vpop.f32.mrf.mxu0
      %v334 = vadd.f32 0.0, %v333
      %335 = vdwg.mxu0
      %336 = vxpose.xlu0.b32.start [1/16] %v302, 128
      %337 = vxpose.xlu0.b32.cont [2/16] %v303, 128
      %338 = vxpose.xlu0.b32.cont [3/16] %v304, 128
      %339 = vxpose.xlu0.b32.cont [4/16] %v305, 128
      %340 = vxpose.xlu0.b32.cont [5/16] 0.0, 128
      %341 = vxpose.xlu0.b32.cont [6/16] 0.0, 128
      %342 = vxpose.xlu0.b32.cont [7/16] 0.0, 128
      %343 = vxpose.xlu0.b32.cont [8/16] 0.0, 128
      %344 = vxpose.xlu0.b32.cont [9/16] 0.0, 128
      %345 = vxpose.xlu0.b32.cont [10/16] 0.0, 128
      %346 = vxpose.xlu0.b32.cont [11/16] 0.0, 128
      %347 = vxpose.xlu0.b32.cont [12/16] 0.0, 128
      %348 = vxpose.xlu0.b32.cont [13/16] 0.0, 128
      %349 = vxpose.xlu0.b32.cont [14/16] 0.0, 128
      %350 = vxpose.xlu0.b32.cont [15/16] 0.0, 128
      %351 = vxpose.xlu0.b32.end [16/16] 0.0, 128
      %v352 = vpop.trf.xlu0
      %v353 = vpop.trf.xlu0
      %v354 = vpop.trf.xlu0
      %v355 = vpop.trf.xlu0
      %v356 = vpop.trf.xlu0
      %v357 = vpop.trf.xlu0
      %v358 = vpop.trf.xlu0
      %v359 = vpop.trf.xlu0
      %v360 = vpop.trf.xlu0
      %v361 = vpop.trf.xlu0
      %v362 = vpop.trf.xlu0
      %v363 = vpop.trf.xlu0
      %v364 = vpop.trf.xlu0
      %v365 = vpop.trf.xlu0
      %v366 = vpop.trf.xlu0
      %v367 = vpop.trf.xlu0
      %v369 = vsel %vm306, %v352, 0
      %371 = vmatpush.xpose.msra.mxu0 0.0
      %372 = vmatpush.xpose.msra.mxu0 0.0
      %373 = vmatpush.xpose.msra.mxu0 0.0
      %374 = vmatpush.xpose.msra.mxu0 0.0
      %375 = vmatpush.xpose.msra.mxu0 0.0
      %376 = vmatpush.xpose.msra.mxu0 0.0
      %377 = vmatpush.xpose.msra.mxu0 0.0
      %378 = vmatpush.xpose.msra.mxu0 0.0
      %379 = vmatpush.xpose.msra.mxu0 0.0
      %380 = vmatpush.xpose.msra.mxu0 0.0
      %381 = vmatpush.xpose.msra.mxu0 0.0
      %382 = vmatpush.xpose.msra.mxu0 0.0
      %383 = vmatpush.xpose.msra.mxu0 0.0
      %384 = vmatpush.xpose.msra.mxu0 0.0
      %385 = vmatpush.xpose.msra.mxu0 %v311
      %386 = vmatpush.xpose.msra.mxu0 %v308
      %387 = vmatmul.f32.gmra.mxu0 %v369
      %v388 = vpop.f32.mrf.mxu0
      %v389 = vadd.f32 0.0, %v388
      %390 = vdwg.mxu0
      %392 = vset.pattern.permute.xlu0 0
      %393 = vperm.xlu0 %392, %v331
      %v394 = vpop.permute.xlu0 %393
      %397 = vset.pattern.permute.xlu0 0
      %398 = vperm.xlu0 %397, %v334
      %v399 = vpop.permute.xlu0 %398
      %v401 = vperm.slane %v389, 0
      %v402 = vadd.f32 %v394, %v401
      %v403 = vadd.f32 %v399, %v401
      %vm404 = vcmp.gt.f32.partialorder %v402, 0.0
      %vm405 = vcmp.gt.f32.partialorder %v403, 0.0
      %v406 = vmul.f32 %v402, 0.01
      %v407 = vmul.f32 %v403, 0.01
      %v408 = vsel %vm404, %v402, %v406
      %v409 = vsel %vm405, %v403, %v407
      %v410 = vsel %vm264, %v408, -1e+12
      %v411 = vsel %vm265, %v409, -1e+12
      %v412 = vsel %vm232, %v410, -inf
      %413 = vmax.xlane.f32.xlu0 %v412
      %v414 = vpop.xlane.xlu0 %413
      %v415 = vsel %vm232, %v411, -inf
      %416 = vmax.xlane.f32.xlu0 %v415
      %v417 = vpop.xlane.xlu0 %416
      %v418 = vsub.f32 %v410, %v414
      %v419 = vsub.f32 %v411, %v417
      %v420 = vmul.f32 %v418, 1.442695
      %v421 = vpow.pop %v420
      %v422 = vmul.f32 %v419, 1.442695
      %v423 = vpow.pop %v422
      %v424 = vsel %vm232, %v421, 0.0
      %425 = vadd.xlane.f32.xlu0 %v424
      %v426 = vpop.xlane.xlu0 %425
      %v427 = vsel %vm232, %v423, 0.0
      %428 = vadd.xlane.f32.xlu0 %v427
      %v429 = vpop.xlane.xlu0 %428
      %v430 = vrcp.pop %v426
      %v431 = vrcp.pop %v429
      %v432 = vmul.f32 %v421, %v430
      %v433 = vmul.f32 %v423, %v431
      %434 = vxpose.xlu0.b32.start [1/16] %v293, 128
      %435 = vxpose.xlu0.b32.cont [2/16] %v296, 128
      %436 = vxpose.xlu0.b32.cont [3/16] 0.0, 128
      %437 = vxpose.xlu0.b32.cont [4/16] 0.0, 128
      %438 = vxpose.xlu0.b32.cont [5/16] 0.0, 128
      %439 = vxpose.xlu0.b32.cont [6/16] 0.0, 128
      %440 = vxpose.xlu0.b32.cont [7/16] 0.0, 128
      %441 = vxpose.xlu0.b32.cont [8/16] 0.0, 128
      %442 = vxpose.xlu0.b32.cont [9/16] 0.0, 128
      %443 = vxpose.xlu0.b32.cont [10/16] 0.0, 128
      %444 = vxpose.xlu0.b32.cont [11/16] 0.0, 128
      %445 = vxpose.xlu0.b32.cont [12/16] 0.0, 128
      %446 = vxpose.xlu0.b32.cont [13/16] 0.0, 128
      %447 = vxpose.xlu0.b32.cont [14/16] 0.0, 128
      %448 = vxpose.xlu0.b32.cont [15/16] 0.0, 128
      %449 = vxpose.xlu0.b32.end [16/16] 0.0, 128
      %v450 = vpop.trf.xlu0
      %v451 = vpop.trf.xlu0
      %v452 = vpop.trf.xlu0
      %v453 = vpop.trf.xlu0
      %v454 = vpop.trf.xlu0
      %v455 = vpop.trf.xlu0
      %v456 = vpop.trf.xlu0
      %v457 = vpop.trf.xlu0
      %v458 = vpop.trf.xlu0
      %v459 = vpop.trf.xlu0
      %v460 = vpop.trf.xlu0
      %v461 = vpop.trf.xlu0
      %v462 = vpop.trf.xlu0
      %v463 = vpop.trf.xlu0
      %v464 = vpop.trf.xlu0
      %v465 = vpop.trf.xlu0
      %v467 = vsel %vm232, %v450, 0
      %v470 = vsel %vm232, %v451, 0
      %v473 = vsel %vm232, %v452, 0
      %v476 = vsel %vm232, %v453, 0
      %v479 = vsel %vm232, %v432, 0
      %v482 = vsel %vm232, %v433, 0
      %484 = vmatpush.xpose.msra.mxu0 0.0
      %485 = vmatpush.xpose.msra.mxu0 0.0
      %486 = vmatpush.xpose.msra.mxu0 0.0
      %487 = vmatpush.xpose.msra.mxu0 0.0
      %488 = vmatpush.xpose.msra.mxu0 0.0
      %489 = vmatpush.xpose.msra.mxu0 0.0
      %490 = vmatpush.xpose.msra.mxu0 0.0
      %491 = vmatpush.xpose.msra.mxu0 0.0
      %492 = vmatpush.xpose.msra.mxu0 0.0
      %493 = vmatpush.xpose.msra.mxu0 0.0
      %494 = vmatpush.xpose.msra.mxu0 0.0
      %495 = vmatpush.xpose.msra.mxu0 0.0
      %496 = vmatpush.xpose.msra.mxu0 0.0
      %497 = vmatpush.xpose.msra.mxu0 0.0
      %498 = vmatpush.xpose.msra.mxu0 %v482
      %499 = vmatpush.xpose.msra.mxu0 %v479
      %500 = vmatmul.f32.gmra.mxu0 %v467
      %v501 = vpop.f32.mrf.mxu0
      %v502 = vadd.f32 0.0, %v501
      %503 = vmatmul.f32.gmra.mxu0 %v470
      %v504 = vpop.f32.mrf.mxu0
      %v505 = vadd.f32 0.0, %v504
      %506 = vmatmul.f32.gmra.mxu0 %v473
      %v507 = vpop.f32.mrf.mxu0
      %v508 = vadd.f32 0.0, %v507
      %509 = vmatmul.f32.gmra.mxu0 %v476
      %v510 = vpop.f32.mrf.mxu0
      %v511 = vadd.f32 0.0, %v510
      %512 = vdwg.mxu0
      %v513 = vmax.f32 %v502, 0.0
      %v514 = vmax.f32 %v505, 0.0
      %v515 = vmax.f32 %v508, 0.0
      %v516 = vmax.f32 %v511, 0.0
      %517 = vst.msk [vmem:[%s197] sm:$0xff] %vm232, %v513
      %518 = vst.msk [vmem:[%s197 + $0x8] sm:$0xff] %vm232, %v514
      %519 = vst.msk [vmem:[%s197 + $0x10] sm:$0xff] %vm232, %v515
      %520 = vst.msk [vmem:[%s197 + $0x18] sm:$0xff] %vm232, %v516
      %p521 = scmp.lt.s32.totalorder %s15, 1
      %s522 = scalar_select %p521, %s15, 1
      %s523 = smul.addr %s522, 4
      %s524 = smul.addr %s523, 8
      %s525 = scalar_lea.vmem %s4, %s524
      // Predicated region
      $region37: #{tpu_custom_call.1} parent=35 // pred_check
        %p526 = pneg %p122
      $region38: #{tpu_custom_call.1} parent=35 // pred_check_branch
        %528 = sbr.rel (%p526) target = $region40
      $region39: #{tpu_custom_call.1} parent=35 // pred_region
        _
      $region40: #{tpu_custom_call.1} parent=35 // pred_fallthru
        _
    $region36: #{tpu_custom_call.1} parent=5 // pred_fallthru
      _
    %p529 = scmp.le.s32.totalorder 2, %s10
    // Predicated region
    $region41: #{tpu_custom_call.1} parent=5 // pred_check
      %p530 = pneg %p529
    $region42: #{tpu_custom_call.1} parent=5 // pred_check_branch
      %532 = sbr.rel (%p530) target = $region44
    $region43: #{tpu_custom_call.1} parent=5 // pred_region
      %s533 = ssub.s32 %s10, 2
      // Predicated region
      $region45: #{tpu_custom_call.1} parent=43 // pred_check
        %p534 = pneg %p128
      $region46: #{tpu_custom_call.1} parent=43 // pred_check_branch
        %536 = sbr.rel (%p534) target = $region48
      $region47: #{tpu_custom_call.1} parent=43 // pred_region
        %p537 = scmp.lt.s32.totalorder %s16, 1
        %s538 = scalar_select %p537, %s16, 1
        %s539 = smul.addr %s538, 4
        %s540 = smul.addr %s539, 8
        %s541 = scalar_lea.vmem %s4, %s540
      $region48: #{tpu_custom_call.1} parent=43 // pred_fallthru
        _
    $region44: #{tpu_custom_call.1} parent=5 // pred_fallthru
      _
  $region6: #{tpu_custom_call.1} parent=0 // loop_footer
    %s14 = sadd.s32 1, %s10
  $region7: #{tpu_custom_call.1} parent=0 // loop_footer_branch
    %9 = sbr.rel target = $region3
  $region8: #{tpu_custom_call.1} parent=0 // loop_exit
    _

</llo_original>
